<compile_context>
chip_gen: v5e
topology: v5e:2x2
jax: 0.10.0
libtpu: 0.0.40
codegen_flags: <defaults>
</compile_context>

<pallas_src>
import jax
import jax.numpy as jnp
from jax.experimental import pallas as pl
from jax.experimental.pallas import tpu as pltpu


# ---------------------------------------------------------------------------
# Kernel
# ---------------------------------------------------------------------------
def encoder_kernel(x_ref, w1_ref, b1_ref, w2_ref, b2_ref, w3_ref, b3_ref,
                   o_ref, acc1_ref, acc2_ref):
    """Fused 3-layer MLP forward for one batch tile.

    Grid = (batch tile i, H1 tile j, D tile k); j and k are reduction axes.
      acc1: (tile_b, tile_j) f32 — layer-1 partial sums for the current H1 chunk.
      acc2: (tile_b, H2p)    f32 — layer-2 partial sums (full width).
    """
    j = pl.program_id(1)
    k = pl.program_id(2)
    last_j = pl.num_programs(1) - 1
    last_k = pl.num_programs(2) - 1

    # Layer-1 accumulator: fold b1 in on the first K step of each H1 chunk.
    @pl.when(k == 0)
    def _init_acc1():
        acc1_ref[...] = jnp.broadcast_to(b1_ref[...], acc1_ref.shape)

    # Layer-2 accumulator: fold b2 in on the very first step of this batch tile.
    @pl.when(jnp.logical_and(j == 0, k == 0))
    def _init_acc2():
        acc2_ref[...] = jnp.broadcast_to(b2_ref[...], acc2_ref.shape)

    # Layer 1: streamed K-tiled matmul (bf16 operands, f32 accumulation).
    acc1_ref[...] += jnp.dot(x_ref[...], w1_ref[...],
                             preferred_element_type=jnp.float32)

    # Layer 2: once this H1 chunk of h1 is complete, consume it.
    # Dropout == identity (eval-mode forward).
    @pl.when(k == last_k)
    def _layer2():
        h1_chunk = jnp.maximum(acc1_ref[...], 0.0).astype(jnp.bfloat16)
        acc2_ref[...] += jnp.dot(h1_chunk, w2_ref[...],
                                 preferred_element_type=jnp.float32)

    # Layer 3 + sigmoid epilogue on the final reduction step.
    @pl.when(jnp.logical_and(j == last_j, k == last_k))
    def _epilogue():
        h2 = jnp.maximum(acc2_ref[...], 0.0)                 # (tile_b, H2p) f32
        # N=1 linear as a VPU mul + lane reduction (avoids an N=1 MXU matmul).
        logits = jnp.sum(h2 * w3_ref[...], axis=-1, keepdims=True) + b3_ref[...]
        # sigmoid: exp on the EUP, approx reciprocal on the EUP (~1e-3 rel err).
        sig = pl.reciprocal(1.0 + jnp.exp(-logits), approx=True)
        o_ref[...] = sig.astype(o_ref.dtype)


# ---------------------------------------------------------------------------
# Host-side helpers
# ---------------------------------------------------------------------------
def _round_up(x, m):
    return ((x + m - 1) // m) * m


def _pad2(a, rows, cols):
    r, c = a.shape
    if (r, c) == (rows, cols):
        return a
    return jnp.pad(a, ((0, rows - r), (0, cols - c)))


def prepare_params(params):
    """Pad weights to 128-multiples and cast to bf16 ONCE, outside the per-call
    hot path. Zero padding is exact (padded rows/cols contribute nothing)."""
    w1 = jnp.asarray(params["w1"])
    w2 = jnp.asarray(params["w2"])
    w3 = jnp.asarray(params["w3"])
    d_in, h1 = w1.shape
    h2 = w2.shape[1]
    dp, h1p, h2p = _round_up(d_in, 128), _round_up(h1, 128), _round_up(h2, 128)
    b1 = jnp.asarray(params["b1"]).reshape(1, h1)
    b2 = jnp.asarray(params["b2"]).reshape(1, h2)
    b3 = jnp.asarray(params["b3"]).reshape(1, 1)
    return dict(
        w1=_pad2(w1.astype(jnp.bfloat16), dp, h1p),
        b1=_pad2(b1.astype(jnp.float32), 1, h1p),
        w2=_pad2(w2.astype(jnp.bfloat16), h1p, h2p),
        b2=_pad2(b2.astype(jnp.float32), 1, h2p),
        w3=_pad2(w3.reshape(1, h2).astype(jnp.float32), 1, h2p),  # row for VPU
        b3=b3.astype(jnp.float32),
        dims=(d_in, h1, h2, dp, h1p, h2p),
    )


def _vmem_capacity_bytes():
    try:
        cap = int(pltpu.get_tpu_info().vmem_capacity_bytes)
        if cap > 0:
            return cap
    except Exception:
        pass
    return 64 * 1024 * 1024   # conservative fallback (v7x per-core VMEM)


def _vmem_bytes(tile_b, tile_k, tile_j, h2p):
    """Double-buffered pipelined blocks + resident accumulators."""
    dbl = 2
    return (dbl * (tile_b * tile_k * 2          # x block (bf16)
                   + tile_k * tile_j * 2        # w1 block (bf16)
                   + tile_j * 4                 # b1 chunk (f32)
                   + tile_j * h2p * 2           # w2 block (bf16)
                   + 2 * h2p * 4 + 4            # b2 + w3 row + b3 (f32)
                   + tile_b * 4)                # output block (f32)
            + tile_b * tile_j * 4               # acc1 scratch
            + tile_b * h2p * 4)                 # acc2 scratch


def _largest_tile(dim, unit, preferred):
    """Largest multiple of `unit` that divides `dim` and is <= preferred."""
    n = dim // unit
    cap = max(1, preferred // unit)
    best = 1
    for d in range(1, n + 1):
        if n % d == 0 and d <= cap:
            best = d
    return best * unit


def _choose_tiles(bp, dp, h1p, h2p, vmem_cap,
                  max_tile_b=None, max_tile_k=None, max_tile_j=None):
    """Generation-aware tile selection.

    Roofline knees (FLOP per streamed-weight byte ~= tile_b): v5e ~240,
    v7x ~311, v6e ~650 -> prefer tile_b ~1024 on 128 MiB parts (v5e/v6e) and
    ~512 on 64 MiB parts (v7x).  Large K/J tiles keep the ~0.35us per-grid-step
    overhead negligible; when tile_k == D_pad the x row-block stays resident
    across all j steps (no HBM re-stream of x).
    """
    big_part = vmem_cap >= (96 << 20)
    pref_b = max_tile_b if max_tile_b else (1024 if big_part else 512)
    pref_k = max_tile_k if max_tile_k else dp          # try to collapse K
    pref_j = max_tile_j if max_tile_j else (2048 if big_part else 1024)
    budget = int(vmem_cap * 0.70)                      # headroom for compiler

    def tiles():
        return (_largest_tile(bp, 8, pref_b),
                _largest_tile(dp, 128, pref_k),
                _largest_tile(h1p, 128, pref_j))

    tb, tk, tj = tiles()
    while _vmem_bytes(tb, tk, tj, h2p) > budget:
        # Halve whichever preference owns the largest shrinkable VMEM share.
        share = {
            "j": (2 * tk * tj * 2 + 2 * tj * h2p * 2 + tb * tj * 4)
                 if pref_j > 128 else -1,
            "k": (2 * tb * tk * 2 + 2 * tk * tj * 2) if pref_k > 128 else -1,
            "b": (2 * tb * tk * 2 + tb * h2p * 4 + tb * tj * 4)
                 if pref_b > 8 else -1,
        }
        axis = max(share, key=share.get)
        if share[axis] < 0:
            break                                       # nothing left to shrink
        if axis == "j":
            pref_j = max(128, pref_j // 2)
        elif axis == "k":
            pref_k = max(128, pref_k // 2)
        else:
            pref_b = max(8, pref_b // 2)
        tb, tk, tj = tiles()
    return tb, tk, tj


def encoder_forward(x, prep, *, max_tile_b=None, max_tile_k=None,
                    max_tile_j=None):
    """sigmoid(relu(relu(x @ w1 + b1) @ w2 + b2) @ w3 + b3) -> (B, 1) f32.

    `prep` must come from `prepare_params` (weights padded + cast to bf16 once,
    outside the hot path).  Dropout is identity (eval-mode forward).
    """
    d_in, h1, h2, dp, h1p, h2p = prep["dims"]
    B, D = x.shape
    assert D == d_in, f"x feature dim {D} != weight input dim {d_in}"

    bp = _round_up(B, 8)
    vmem_cap = _vmem_capacity_bytes()
    tile_b, tile_k, tile_j = _choose_tiles(
        bp, dp, h1p, h2p, vmem_cap,
        max_tile_b=max_tile_b, max_tile_k=max_tile_k, max_tile_j=max_tile_j)
    assert bp % tile_b == 0 and dp % tile_k == 0 and h1p % tile_j == 0

    # Single cheap activation pass: bf16 MXU operand + pad to padded widths.
    x_bf = x.astype(jnp.bfloat16)
    if (bp, dp) != (B, D):
        x_bf = jnp.pad(x_bf, ((0, bp - B), (0, dp - D)))

    grid = (bp // tile_b, h1p // tile_j, dp // tile_k)

    needed = _vmem_bytes(tile_b, tile_k, tile_j, h2p)
    vmem_limit = int(min(vmem_cap, max(int(needed * 1.3), 16 << 20)))

    in_specs = [
        pl.BlockSpec((tile_b, tile_k), lambda i, j, k: (i, k)),   # x
        pl.BlockSpec((tile_k, tile_j), lambda i, j, k: (k, j)),   # w1 (streamed)
        pl.BlockSpec((1, tile_j),      lambda i, j, k: (0, j)),   # b1 chunk
        pl.BlockSpec((tile_j, h2p),    lambda i, j, k: (j, 0)),   # w2 (streamed)
        pl.BlockSpec((1, h2p),         lambda i, j, k: (0, 0)),   # b2
        pl.BlockSpec((1, h2p),         lambda i, j, k: (0, 0)),   # w3 row
        pl.BlockSpec((1, 1),           lambda i, j, k: (0, 0)),   # b3
    ]
    out_spec = pl.BlockSpec((tile_b, 1), lambda i, j, k: (i, 0))

    out = pl.pallas_call(
        encoder_kernel,
        out_shape=jax.ShapeDtypeStruct((bp, 1), jnp.float32),
        grid_spec=pltpu.PrefetchScalarGridSpec(
            num_scalar_prefetch=0,
            grid=grid,
            in_specs=in_specs,
            out_specs=out_spec,
            scratch_shapes=[pltpu.VMEM((tile_b, tile_j), jnp.float32),
                            pltpu.VMEM((tile_b, h2p), jnp.float32)],
        ),
        compiler_params=pltpu.CompilerParams(
            # Batch axis shards across v7x's two TensorCores when grid[0] >= 2;
            # reduction axes are sequential.
            dimension_semantics=("parallel", "arbitrary", "arbitrary"),
            vmem_limit_bytes=vmem_limit,
        ),
    )(x_bf, prep["w1"], prep["b1"], prep["w2"], prep["b2"],
      prep["w3"], prep["b3"])

    return out[:B] if bp != B else out


def init_params(key, d_in, h1, h2):
    """Deterministic synthetic parameters (stand-in for the torch checkpoint)."""
    k1, k2, k3, k4, k5, k6 = jax.random.split(key, 6)
    return dict(
        w1=jax.random.normal(k1, (d_in, h1), jnp.float32) / jnp.sqrt(d_in),
        b1=0.1 * jax.random.normal(k4, (h1,), jnp.float32),
        w2=jax.random.normal(k2, (h1, h2), jnp.float32) / jnp.sqrt(h1),
        b2=0.1 * jax.random.normal(k5, (h2,), jnp.float32),
        w3=jax.random.normal(k3, (h2, 1), jnp.float32) / jnp.sqrt(h2),
        b3=0.1 * jax.random.normal(k6, (1,), jnp.float32),
    )


if __name__ == "__main__":
    # Small, intentionally ragged stand-ins for the production layers
    # [8182, 4096, 1]: exercises the zero-padding path (D, H1, H2 not multiples
    # of 128) and, via small tile caps, the multi-step (i, j, k) streamed grid.
    B, D_IN, H1, H2 = 192, 320, 250, 100

    key = jax.random.PRNGKey(0)
    kx, kp = jax.random.split(key)
    x = jax.random.normal(kx, (B, D_IN), jnp.float32)
    params = init_params(kp, D_IN, H1, H2)
    prep = prepare_params(params)          # one-time, outside the hot path

    # 1) Forced small tiles -> grid (3, 2, 3): streamed K / H1 accumulation.
    out_small = jax.block_until_ready(
        encoder_forward(x, prep, max_tile_b=64, max_tile_k=128, max_tile_j=128))
    # 2) Auto (generation-aware) tile selection.
    out_auto = jax.block_until_ready(encoder_forward(x, prep))

    assert out_small.shape == (B, 1) and out_auto.shape == (B, 1)

    # Reference matching the kernel's precision (bf16 MXU operands, f32 acc).
    xb = x.astype(jnp.bfloat16)
    w1b = params["w1"].astype(jnp.bfloat16)
    w2b = params["w2"].astype(jnp.bfloat16)
    h1v = jnp.maximum(jnp.dot(xb, w1b, preferred_element_type=jnp.float32)
                      + params["b1"], 0.0)
    h2v = jnp.maximum(jnp.dot(h1v.astype(jnp.bfloat16), w2b,
                              preferred_element_type=jnp.float32)
                      + params["b2"], 0.0)
    ref_bf16 = jax.nn.sigmoid(h2v @ params["w3"] + params["b3"])

    assert jnp.allclose(out_small, ref_bf16, atol=5e-3, rtol=5e-3)
    assert jnp.allclose(out_auto, ref_bf16, atol=5e-3, rtol=5e-3)
    assert jnp.allclose(out_small, out_auto, atol=5e-3, rtol=5e-3)

    # Loose sanity check against a full-f32 reference.
    h1f = jnp.maximum(x @ params["w1"] + params["b1"], 0.0)
    h2f = jnp.maximum(h1f @ params["w2"] + params["b2"], 0.0)
    ref_f32 = jax.nn.sigmoid(h2f @ params["w3"] + params["b3"])
    assert jnp.allclose(out_small, ref_f32, atol=5e-2, rtol=5e-2)

    print("KERNEL_OK")
</pallas_src>

<mosaic_0001>
module attributes {stable_mosaic.version = 11 : i64} {
  func.func @encoder_kernel(%arg0: i32, %arg1: i32, %arg2: i32, %arg3: memref<64x128xbf16, #tpu.memory_space<vmem>>, %arg4: memref<128x128xbf16, #tpu.memory_space<vmem>>, %arg5: memref<1x128xf32, #tpu.memory_space<vmem>>, %arg6: memref<128x128xbf16, #tpu.memory_space<vmem>>, %arg7: memref<1x128xf32, #tpu.memory_space<vmem>>, %arg8: memref<1x128xf32, #tpu.memory_space<vmem>>, %arg9: memref<1x1xf32, #tpu.memory_space<vmem>>, %arg10: memref<64x1xf32, #tpu.memory_space<vmem>>, %arg11: memref<64x128xf32, #tpu.memory_space<vmem>>, %arg12: memref<64x128xf32, #tpu.memory_space<vmem>>) attributes {dimension_semantics = [#tpu.dimension_semantics<parallel>, #tpu.dimension_semantics<arbitrary>, #tpu.dimension_semantics<arbitrary>], iteration_bounds = array<i64: 3, 2, 3>, scalar_prefetch = 0 : i64, scratch_operands = 2 : i64, tpu.core_type = #tpu.core_type<tc>, window_params = [{transform_indices = @transform_0, window_bounds = array<i64: 64, 128>}, {transform_indices = @transform_1, window_bounds = array<i64: 128, 128>}, {transform_indices = @transform_2, window_bounds = array<i64: 1, 128>}, {transform_indices = @transform_3, window_bounds = array<i64: 128, 128>}, {pipeline_mode = #tpu.pipeline_mode<synchronous>, transform_indices = @transform_4, window_bounds = array<i64: 1, 128>}, {pipeline_mode = #tpu.pipeline_mode<synchronous>, transform_indices = @transform_5, window_bounds = array<i64: 1, 128>}, {pipeline_mode = #tpu.pipeline_mode<synchronous>, transform_indices = @transform_6, window_bounds = array<i64: 1, 1>}, {transform_indices = @transform_7, window_bounds = array<i64: 64, 1>}]} {
    %c0_i32 = arith.constant 0 : i32
    %0 = arith.cmpi eq, %arg2, %c0_i32 : i32
    %1 = arith.extui %0 : i1 to i32
    %c0_i32_0 = arith.constant 0 : i32
    %2 = arith.cmpi ne, %1, %c0_i32_0 : i32
    scf.if %2 {
      %c0_14 = arith.constant 0 : index
      %c0_15 = arith.constant 0 : index
      %22 = vector.load %arg5[%c0_14, %c0_15] : memref<1x128xf32, #tpu.memory_space<vmem>>, vector<1x128xf32>
      %23 = vector.shape_cast %22 : vector<1x128xf32> to vector<1x128xf32>
      %24 = vector.broadcast %23 : vector<1x128xf32> to vector<64x128xf32>
      %c0_16 = arith.constant 0 : index
      %c0_17 = arith.constant 0 : index
      %25 = vector.load %arg11[%c0_16, %c0_17] : memref<64x128xf32, #tpu.memory_space<vmem>>, vector<64x128xf32>
      tpu.vector_store %arg11[%c0_16, %c0_17], %24 {strides = array<i32>} : memref<64x128xf32, #tpu.memory_space<vmem>>, vector<64x128xf32>,
    } else {
    }
    %c0_i32_1 = arith.constant 0 : i32
    %3 = arith.cmpi eq, %arg1, %c0_i32_1 : i32
    %c0_i32_2 = arith.constant 0 : i32
    %4 = arith.cmpi eq, %arg2, %c0_i32_2 : i32
    %5 = arith.andi %3, %4 : i1
    %6 = arith.extui %5 : i1 to i32
    %c0_i32_3 = arith.constant 0 : i32
    %7 = arith.cmpi ne, %6, %c0_i32_3 : i32
    scf.if %7 {
      %c0_14 = arith.constant 0 : index
      %c0_15 = arith.constant 0 : index
      %22 = vector.load %arg7[%c0_14, %c0_15] : memref<1x128xf32, #tpu.memory_space<vmem>>, vector<1x128xf32>
      %23 = vector.shape_cast %22 : vector<1x128xf32> to vector<1x128xf32>
      %24 = vector.broadcast %23 : vector<1x128xf32> to vector<64x128xf32>
      %c0_16 = arith.constant 0 : index
      %c0_17 = arith.constant 0 : index
      %25 = vector.load %arg12[%c0_16, %c0_17] : memref<64x128xf32, #tpu.memory_space<vmem>>, vector<64x128xf32>
      tpu.vector_store %arg12[%c0_16, %c0_17], %24 {strides = array<i32>} : memref<64x128xf32, #tpu.memory_space<vmem>>, vector<64x128xf32>,
    } else {
    }
    %c0 = arith.constant 0 : index
    %c0_4 = arith.constant 0 : index
    %8 = vector.load %arg11[%c0, %c0_4] : memref<64x128xf32, #tpu.memory_space<vmem>>, vector<64x128xf32>
    %c0_5 = arith.constant 0 : index
    %c0_6 = arith.constant 0 : index
    %9 = vector.load %arg3[%c0_5, %c0_6] : memref<64x128xbf16, #tpu.memory_space<vmem>>, vector<64x128xbf16>
    %c0_7 = arith.constant 0 : index
    %c0_8 = arith.constant 0 : index
    %10 = vector.load %arg4[%c0_7, %c0_8] : memref<128x128xbf16, #tpu.memory_space<vmem>>, vector<128x128xbf16>
    %cst = arith.constant dense<0.000000e+00> : vector<64x128xf32>
    %11 = tpu.matmul %9, %10, %cst {dimension_numbers = #tpu.dot_dimension_numbers<[1], [0], [0], [1], [0, 0, 1, 1], [], []>} : vector<64x128xbf16>, vector<128x128xbf16>, vector<64x128xf32> -> vector<64x128xf32>
    %12 = arith.addf %8, %11 : vector<64x128xf32>
    %c0_9 = arith.constant 0 : index
    %c0_10 = arith.constant 0 : index
    %13 = vector.load %arg11[%c0_9, %c0_10] : memref<64x128xf32, #tpu.memory_space<vmem>>, vector<64x128xf32>
    tpu.vector_store %arg11[%c0_9, %c0_10], %12 {strides = array<i32>} : memref<64x128xf32, #tpu.memory_space<vmem>>, vector<64x128xf32>,
    %c2_i32 = arith.constant 2 : i32
    %14 = arith.cmpi eq, %arg2, %c2_i32 : i32
    %15 = arith.extui %14 : i1 to i32
    %c0_i32_11 = arith.constant 0 : i32
    %16 = arith.cmpi ne, %15, %c0_i32_11 : i32
    scf.if %16 {
      %c0_14 = arith.constant 0 : index
      %c0_15 = arith.constant 0 : index
      %22 = vector.load %arg11[%c0_14, %c0_15] : memref<64x128xf32, #tpu.memory_space<vmem>>, vector<64x128xf32>
      %cst_16 = arith.constant 0.000000e+00 : f32
      %23 = vector.broadcast %cst_16 : f32 to vector<64x128xf32>
      %24 = arith.maximumf %22, %23 : vector<64x128xf32>
      %25 = arith.truncf %24 : vector<64x128xf32> to vector<64x128xbf16>
      %c0_17 = arith.constant 0 : index
      %c0_18 = arith.constant 0 : index
      %26 = vector.load %arg12[%c0_17, %c0_18] : memref<64x128xf32, #tpu.memory_space<vmem>>, vector<64x128xf32>
      %c0_19 = arith.constant 0 : index
      %c0_20 = arith.constant 0 : index
      %27 = vector.load %arg6[%c0_19, %c0_20] : memref<128x128xbf16, #tpu.memory_space<vmem>>, vector<128x128xbf16>
      %cst_21 = arith.constant dense<0.000000e+00> : vector<64x128xf32>
      %28 = tpu.matmul %25, %27, %cst_21 {dimension_numbers = #tpu.dot_dimension_numbers<[1], [0], [0], [1], [0, 0, 1, 1], [], []>} : vector<64x128xbf16>, vector<128x128xbf16>, vector<64x128xf32> -> vector<64x128xf32>
      %29 = arith.addf %26, %28 : vector<64x128xf32>
      %c0_22 = arith.constant 0 : index
      %c0_23 = arith.constant 0 : index
      %30 = vector.load %arg12[%c0_22, %c0_23] : memref<64x128xf32, #tpu.memory_space<vmem>>, vector<64x128xf32>
      tpu.vector_store %arg12[%c0_22, %c0_23], %29 {strides = array<i32>} : memref<64x128xf32, #tpu.memory_space<vmem>>, vector<64x128xf32>,
    } else {
    }
    %c1_i32 = arith.constant 1 : i32
    %17 = arith.cmpi eq, %arg1, %c1_i32 : i32
    %c2_i32_12 = arith.constant 2 : i32
    %18 = arith.cmpi eq, %arg2, %c2_i32_12 : i32
    %19 = arith.andi %17, %18 : i1
    %20 = arith.extui %19 : i1 to i32
    %c0_i32_13 = arith.constant 0 : i32
    %21 = arith.cmpi ne, %20, %c0_i32_13 : i32
    scf.if %21 {
      %c0_14 = arith.constant 0 : index
      %c0_15 = arith.constant 0 : index
      %22 = vector.load %arg12[%c0_14, %c0_15] : memref<64x128xf32, #tpu.memory_space<vmem>>, vector<64x128xf32>
      %cst_16 = arith.constant 0.000000e+00 : f32
      %23 = vector.broadcast %cst_16 : f32 to vector<64x128xf32>
      %24 = arith.maximumf %22, %23 : vector<64x128xf32>
      %c0_17 = arith.constant 0 : index
      %c0_18 = arith.constant 0 : index
      %25 = vector.load %arg8[%c0_17, %c0_18] : memref<1x128xf32, #tpu.memory_space<vmem>>, vector<1x128xf32>
      %26 = vector.broadcast %25 : vector<1x128xf32> to vector<64x128xf32>
      %27 = arith.mulf %24, %26 : vector<64x128xf32>
      %cst_19 = arith.constant dense<0.000000e+00> : vector<64xf32>
      %28 = vector.multi_reduction <add>, %27, %cst_19 [1] : vector<64x128xf32> to vector<64xf32>
      %29 = vector.shape_cast %28 : vector<64xf32> to vector<64x1xf32>
      %c0_20 = arith.constant 0 : index
      %c0_21 = arith.constant 0 : index
      %30 = vector.load %arg9[%c0_20, %c0_21] : memref<1x1xf32, #tpu.memory_space<vmem>>, vector<1x1xf32>
      %31 = vector.broadcast %30 : vector<1x1xf32> to vector<64x1xf32>
      %32 = arith.addf %29, %31 : vector<64x1xf32>
      %cst_22 = arith.constant 0.000000e+00 : f32
      %33 = vector.broadcast %cst_22 : f32 to vector<64x1xf32>
      %34 = arith.subf %33, %32 : vector<64x1xf32>
      %35 = math.exp %34 : vector<64x1xf32>
      %cst_23 = arith.constant 1.000000e+00 : f32
      %36 = vector.broadcast %cst_23 : f32 to vector<64x1xf32>
      %37 = arith.addf %36, %35 : vector<64x1xf32>
      %38 = tpu.reciprocal %37 {approx = true} : vector<64x1xf32> -> vector<64x1xf32>
      %c0_24 = arith.constant 0 : index
      %c0_25 = arith.constant 0 : index
      %39 = vector.load %arg10[%c0_24, %c0_25] : memref<64x1xf32, #tpu.memory_space<vmem>>, vector<64x1xf32>
      tpu.vector_store %arg10[%c0_24, %c0_25], %38 {strides = array<i32>} : memref<64x1xf32, #tpu.memory_space<vmem>>, vector<64x1xf32>,
    } else {
    }
    return
  }
  func.func @transform_0(%arg0: i32, %arg1: i32, %arg2: i32) -> (i32, i32) {
    %c0_i32 = arith.constant 0 : i32
    return %arg0, %arg2 : i32, i32
  }
  func.func @transform_1(%arg0: i32, %arg1: i32, %arg2: i32) -> (i32, i32) {
    %c0_i32 = arith.constant 0 : i32
    return %arg2, %arg1 : i32, i32
  }
  func.func @transform_2(%arg0: i32, %arg1: i32, %arg2: i32) -> (i32, i32) {
    %c0_i32 = arith.constant 0 : i32
    %c0_i32_0 = arith.constant 0 : i32
    return %c0_i32, %arg1 : i32, i32
  }
  func.func @transform_3(%arg0: i32, %arg1: i32, %arg2: i32) -> (i32, i32) {
    %c0_i32 = arith.constant 0 : i32
    %c0_i32_0 = arith.constant 0 : i32
    return %arg1, %c0_i32 : i32, i32
  }
  func.func @transform_4(%arg0: i32, %arg1: i32, %arg2: i32) -> (i32, i32) {
    %c0_i32 = arith.constant 0 : i32
    %c0_i32_0 = arith.constant 0 : i32
    %c0_i32_1 = arith.constant 0 : i32
    return %c0_i32, %c0_i32_0 : i32, i32
  }
  func.func @transform_5(%arg0: i32, %arg1: i32, %arg2: i32) -> (i32, i32) {
    %c0_i32 = arith.constant 0 : i32
    %c0_i32_0 = arith.constant 0 : i32
    %c0_i32_1 = arith.constant 0 : i32
    return %c0_i32, %c0_i32_0 : i32, i32
  }
  func.func @transform_6(%arg0: i32, %arg1: i32, %arg2: i32) -> (i32, i32) {
    %c0_i32 = arith.constant 0 : i32
    %c0_i32_0 = arith.constant 0 : i32
    %c0_i32_1 = arith.constant 0 : i32
    return %c0_i32, %c0_i32_0 : i32, i32
  }
  func.func @transform_7(%arg0: i32, %arg1: i32, %arg2: i32) -> (i32, i32) {
    %c0_i32 = arith.constant 0 : i32
    %c0_i32_0 = arith.constant 0 : i32
    return %arg0, %c0_i32 : i32, i32
  }
}

</mosaic_0001>

<llo_original>
// kernel: tpu_custom_call.1
$region0: #{tpu_custom_call.1}
  #allocation0 [shape = 'u32[]', space=smem, size = 0x4, offset = 0x4, fixed_abs, tag = 'smem constant byte address 0x4 - core index']
  #allocation1 [shape = 'u32[72,128]{1,0:T(1,128)}', space=vmem, size = 0x9000, scoped, tag = 'internal scratch']
  #allocation2 [shape = 'f32[64,128]{1,0:T(8,128)}', space=vmem, size = 0x8000, scoped, tag = 'scratch operand']
  #allocation3 [shape = 'f32[64,128]{1,0:T(8,128)}', space=vmem, size = 0x8000, scoped, tag = 'scratch operand']
  #allocation4 [shape = 'f32[1,1]{1,0:T(1,128)S(1)}', space=vmem, size = 0x200, scoped, tag = 'scoped memory for tpu_custom_call.1']
  %s0 = inlined_call_operand.hbm [shape: bf16[192,384], index: 0, kind: input, shape index: {}]
  %s1 = inlined_call_operand.hbm [shape: bf16[384,256], index: 1, kind: input, shape index: {}]
  %s2 = inlined_call_operand.vmem [shape: f32[1,256], index: 2, kind: input, shape index: {}]
  %s3 = inlined_call_operand.hbm [shape: bf16[256,128], index: 3, kind: input, shape index: {}]
  %s4 = inlined_call_operand.vmem [shape: f32[1,128], index: 4, kind: input, shape index: {}]
  %s5 = inlined_call_operand.vmem [shape: f32[1,128], index: 5, kind: input, shape index: {}]
  %s6 = inlined_call_operand.<no memory space> [shape: f32[1,1], index: 6, kind: input, shape index: {}]
  %s7 = inlined_call_operand.vmem [shape: f32[192,1], index: 7, kind: output, shape index: {}]
  %s8 = sld [smem:[#allocation0]]
  $region89: #{tpu_custom_call.1} parent=0
    _
  %s10 = ssub.s32 1, %s8
  %s11 = scalar_select 0, %s10, %s8
  %v12 = vstv %s6
  %13 = vst [vmem:[#allocation4] sm:$0x1] %v12
  $region1: #{tpu_custom_call.1} parent=0
    #allocation5 [shape = 'u8[32768]{0}', space=vmem, size = 0x8000, scoped, tag = 'input window, operand 0']
    #allocation6 [shape = 's32[2]{0}', space=sflag, size = 0x8, scoped, tag = 'scoped memory for tpu_custom_call.1']
    #allocation7 [shape = 'u8[65536]{0}', space=vmem, size = 0x10000, scoped, tag = 'input window, operand 1']
    #allocation8 [shape = 's32[2]{0}', space=sflag, size = 0x8, scoped, tag = 'scoped memory for tpu_custom_call.1']
    #allocation9 [shape = 'u8[65536]{0}', space=vmem, size = 0x10000, scoped, tag = 'input window, operand 3']
    %14 = vsyncpa [#allocation6], 0
    %s15 = scalar_lea.sflag [#allocation6], 1
    %16 = vsyncpa %s15, 0
    %17 = vsyncpa [#allocation8], 0
    %s18 = scalar_lea.sflag [#allocation8], 1
    %19 = vsyncpa %s18, 0
    loop: start=0, step=1, limit=20
    $region2: #{tpu_custom_call.1} parent=1 // loop_pre_header
      _
    $region3: #{tpu_custom_call.1} parent=1 // loop_header
      %s21 = sphi 0, %s25
      %p22 = scmp.ge.s32.totalorder %s21, 20
      %s28 = sphi 0, %s47
      %s29 = sphi 0, %s43
      %s30 = sphi 0, %s39
      %s31 = sphi 0, %s28
      %s32 = sphi 0, %s29
      %s33 = sphi 0, %s30
      %s34 = sphi 0, %s31
      %s35 = sphi 0, %s32
      %s36 = sphi 0, %s33
      %s52 = sphi 0, %s54
      %s55 = sphi 0, %s52
      %s56 = sphi 0, %s55
      %s72 = sphi 0, %s56
      %s80 = sphi 0, %s82
      %s83 = sphi 0, %s80
      %s84 = sphi 0, %s83
      %s100 = sphi 0, %s84
      %s106 = sphi 0, %s108
      %s109 = sphi 0, %s106
      %s110 = sphi 0, %s109
      %s126 = sphi 0, %s110
      %s132 = sphi 0, %s134
      %s135 = sphi 0, %s132
      %s136 = sphi 0, %s135
      %s152 = sphi 0, %s136
      %s156 = sphi 0, %s156
      %s158 = sphi 0, %s156
      %s159 = sphi 0, %s158
      %s173 = sphi 0, %s159
      %s177 = sphi 0, %s177
      %s179 = sphi 0, %s177
      %s180 = sphi 0, %s179
      %s194 = sphi 0, %s180
      %s198 = sphi 0, %s198
      %s200 = sphi 0, %s198
      %s201 = sphi 0, %s200
      %s215 = sphi 0, %s201
      %s221 = sphi 0, %s223
      %s224 = sphi 0, %s221
      %s225 = sphi 0, %s224
      %s241 = sphi 0, %s225
    $region4: #{tpu_custom_call.1} parent=1 // loop_header_branch
      %24 = sbr.rel (%p22) target = $region8
    $region5: #{tpu_custom_call.1} parent=1 // loop_body
      %s26 = ssub.s32 %s21, 1
      %s27 = ssub.s32 %s21, 2
      %s37 = sadd.s32 1, %s30
      %p38 = scmp.ge.s32.totalorder %s37, 3
      %s39 = scalar_select %p38, 0, %s37
      %s40 = sadd.s32 1, %s29
      %s41 = scalar_select %p38, %s40, %s29
      %p42 = scmp.ge.s32.totalorder %s41, 2
      %s43 = scalar_select %p42, 0, %s41
      %s44 = sadd.s32 1, %s28
      %s45 = scalar_select %p42, %s44, %s28
      %p46 = scmp.ge.s32.totalorder %s45, 3
      %s47 = scalar_select %p46, 0, %s45
      %s48 = ssub.s32 %s28, %s47
      %s49 = ssub.s32 %s30, %s39
      %s50 = sor.u32 %s48, %s49
      %p51 = scmp.eq.s32.totalorder %s50, 0
      %s53 = sadd.s32 %s52, 1
      %s54 = scalar_select %p51, %s52, %s53
      %p57 = pneg %p51
      %p58 = scmp.eq.s32.totalorder %s21, 17
      %p59 = por %p57, %p58
      %p60 = scmp.ne.s32.totalorder %s52, %s55
      %p61 = scmp.eq.s32.totalorder %s21, 0
      %p62 = por %p60, %p61
      %p63 = scmp.ne.s32.totalorder %s52, %s55
      %p64 = scmp.eq.s32.totalorder %s26, 17
      %p65 = por %p63, %p64
      %p66 = scmp.ne.s32.totalorder %s55, %s56
      %p67 = scmp.eq.s32.totalorder %s26, 0
      %p68 = por %p66, %p67
      %p69 = scmp.ne.s32.totalorder %s55, %s56
      %p70 = scmp.eq.s32.totalorder %s27, 17
      %p71 = por %p69, %p70
      %p73 = scmp.ne.s32.totalorder %s56, %s72
      %p74 = scmp.eq.s32.totalorder %s27, 0
      %p75 = por %p73, %p74
      %s76 = ssub.s32 %s30, %s39
      %s77 = ssub.s32 %s29, %s43
      %s78 = sor.u32 %s76, %s77
      %p79 = scmp.eq.s32.totalorder %s78, 0
      %s81 = sadd.s32 %s80, 1
      %s82 = scalar_select %p79, %s80, %s81
      %p85 = pneg %p79
      %p86 = scmp.eq.s32.totalorder %s21, 17
      %p87 = por %p85, %p86
      %p88 = scmp.ne.s32.totalorder %s80, %s83
      %p89 = scmp.eq.s32.totalorder %s21, 0
      %p90 = por %p88, %p89
      %p91 = scmp.ne.s32.totalorder %s80, %s83
      %p92 = scmp.eq.s32.totalorder %s26, 17
      %p93 = por %p91, %p92
      %p94 = scmp.ne.s32.totalorder %s83, %s84
      %p95 = scmp.eq.s32.totalorder %s26, 0
      %p96 = por %p94, %p95
      %p97 = scmp.ne.s32.totalorder %s83, %s84
      %p98 = scmp.eq.s32.totalorder %s27, 17
      %p99 = por %p97, %p98
      %p101 = scmp.ne.s32.totalorder %s84, %s100
      %p102 = scmp.eq.s32.totalorder %s27, 0
      %p103 = por %p101, %p102
      %s104 = ssub.s32 %s29, %s43
      %p105 = scmp.eq.s32.totalorder %s104, 0
      %s107 = sadd.s32 %s106, 1
      %s108 = scalar_select %p105, %s106, %s107
      %p111 = pneg %p105
      %p112 = scmp.eq.s32.totalorder %s21, 17
      %p113 = por %p111, %p112
      %p114 = scmp.ne.s32.totalorder %s106, %s109
      %p115 = scmp.eq.s32.totalorder %s21, 0
      %p116 = por %p114, %p115
      %p117 = scmp.ne.s32.totalorder %s106, %s109
      %p118 = scmp.eq.s32.totalorder %s26, 17
      %p119 = por %p117, %p118
      %p120 = scmp.ne.s32.totalorder %s109, %s110
      %p121 = scmp.eq.s32.totalorder %s26, 0
      %p122 = por %p120, %p121
      %p123 = scmp.ne.s32.totalorder %s109, %s110
      %p124 = scmp.eq.s32.totalorder %s27, 17
      %p125 = por %p123, %p124
      %p127 = scmp.ne.s32.totalorder %s110, %s126
      %p128 = scmp.eq.s32.totalorder %s27, 0
      %p129 = por %p127, %p128
      %s130 = ssub.s32 %s29, %s43
      %p131 = scmp.eq.s32.totalorder %s130, 0
      %s133 = sadd.s32 %s132, 1
      %s134 = scalar_select %p131, %s132, %s133
      %p137 = pneg %p131
      %p138 = scmp.eq.s32.totalorder %s21, 17
      %p139 = por %p137, %p138
      %p140 = scmp.ne.s32.totalorder %s132, %s135
      %p141 = scmp.eq.s32.totalorder %s21, 0
      %p142 = por %p140, %p141
      %p143 = scmp.ne.s32.totalorder %s132, %s135
      %p144 = scmp.eq.s32.totalorder %s26, 17
      %p145 = por %p143, %p144
      %p146 = scmp.ne.s32.totalorder %s135, %s136
      %p147 = scmp.eq.s32.totalorder %s26, 0
      %p148 = por %p146, %p147
      %p149 = scmp.ne.s32.totalorder %s135, %s136
      %p150 = scmp.eq.s32.totalorder %s27, 17
      %p151 = por %p149, %p150
      %p153 = scmp.ne.s32.totalorder %s136, %s152
      %p154 = scmp.eq.s32.totalorder %s27, 0
      %p155 = por %p153, %p154
      %s157 = sadd.s32 %s156, 1
      %p160 = scmp.eq.s32.totalorder %s21, 17
      %p161 = scmp.ne.s32.totalorder %s156, %s158
      %p162 = scmp.eq.s32.totalorder %s21, 0
      %p163 = por %p161, %p162
      %p164 = scmp.ne.s32.totalorder %s156, %s158
      %p165 = scmp.eq.s32.totalorder %s26, 17
      %p166 = por %p164, %p165
      %p167 = scmp.ne.s32.totalorder %s158, %s159
      %p168 = scmp.eq.s32.totalorder %s26, 0
      %p169 = por %p167, %p168
      %p170 = scmp.ne.s32.totalorder %s158, %s159
      %p171 = scmp.eq.s32.totalorder %s27, 17
      %p172 = por %p170, %p171
      %p174 = scmp.ne.s32.totalorder %s159, %s173
      %p175 = scmp.eq.s32.totalorder %s27, 0
      %p176 = por %p174, %p175
      %s178 = sadd.s32 %s177, 1
      %p181 = scmp.eq.s32.totalorder %s21, 17
      %p182 = scmp.ne.s32.totalorder %s177, %s179
      %p183 = scmp.eq.s32.totalorder %s21, 0
      %p184 = por %p182, %p183
      %p185 = scmp.ne.s32.totalorder %s177, %s179
      %p186 = scmp.eq.s32.totalorder %s26, 17
      %p187 = por %p185, %p186
      %p188 = scmp.ne.s32.totalorder %s179, %s180
      %p189 = scmp.eq.s32.totalorder %s26, 0
      %p190 = por %p188, %p189
      %p191 = scmp.ne.s32.totalorder %s179, %s180
      %p192 = scmp.eq.s32.totalorder %s27, 17
      %p193 = por %p191, %p192
      %p195 = scmp.ne.s32.totalorder %s180, %s194
      %p196 = scmp.eq.s32.totalorder %s27, 0
      %p197 = por %p195, %p196
      %s199 = sadd.s32 %s198, 1
      %p202 = scmp.eq.s32.totalorder %s21, 17
      %p203 = scmp.ne.s32.totalorder %s198, %s200
      %p204 = scmp.eq.s32.totalorder %s21, 0
      %p205 = por %p203, %p204
      %p206 = scmp.ne.s32.totalorder %s198, %s200
      %p207 = scmp.eq.s32.totalorder %s26, 17
      %p208 = por %p206, %p207
      %p209 = scmp.ne.s32.totalorder %s200, %s201
      %p210 = scmp.eq.s32.totalorder %s26, 0
      %p211 = por %p209, %p210
      %p212 = scmp.ne.s32.totalorder %s200, %s201
      %p213 = scmp.eq.s32.totalorder %s27, 17
      %p214 = por %p212, %p213
      %p216 = scmp.ne.s32.totalorder %s201, %s215
      %p217 = scmp.eq.s32.totalorder %s27, 0
      %p218 = por %p216, %p217
      %s219 = ssub.s32 %s28, %s47
      %p220 = scmp.eq.s32.totalorder %s219, 0
      %s222 = sadd.s32 %s221, 1
      %s223 = scalar_select %p220, %s221, %s222
      %p226 = pneg %p220
      %p227 = scmp.eq.s32.totalorder %s21, 17
      %p228 = por %p226, %p227
      %p229 = scmp.ne.s32.totalorder %s221, %s224
      %p230 = scmp.eq.s32.totalorder %s21, 0
      %p231 = por %p229, %p230
      %p232 = scmp.ne.s32.totalorder %s221, %s224
      %p233 = scmp.eq.s32.totalorder %s26, 17
      %p234 = por %p232, %p233
      %p235 = scmp.ne.s32.totalorder %s224, %s225
      %p236 = scmp.eq.s32.totalorder %s26, 0
      %p237 = por %p235, %p236
      %p238 = scmp.ne.s32.totalorder %s224, %s225
      %p239 = scmp.eq.s32.totalorder %s27, 17
      %p240 = por %p238, %p239
      %p242 = scmp.ne.s32.totalorder %s225, %s241
      %p243 = scmp.eq.s32.totalorder %s27, 0
      %p244 = por %p242, %p243
      %p245 = scmp.le.s32.totalorder 1, %s21
      %p246 = scmp.lt.s32.totalorder %s21, 19
      %p247 = pnand %p245, %p246
      %p248 = pneg %p247
      // Predicated region
      $region9: #{tpu_custom_call.1} parent=5 // pred_check
        _
      $region10: #{tpu_custom_call.1} parent=5 // pred_check_branch
        %250 = sbr.rel (%p247) target = $region12
      $region11: #{tpu_custom_call.1} parent=5 // pred_region
        %s251 = ssub.s32 %s21, 1
        // Predicated region
        $region13: #{tpu_custom_call.1} parent=11 // pred_check
          %p252 = pneg %p169
        $region14: #{tpu_custom_call.1} parent=11 // pred_check_branch
          %254 = sbr.rel (%p252) target = $region16
        $region15: #{tpu_custom_call.1} parent=11 // pred_region
          _
        $region16: #{tpu_custom_call.1} parent=11 // pred_fallthru
          _
        // Predicated region
        $region17: #{tpu_custom_call.1} parent=11 // pred_check
          %p255 = pneg %p190
        $region18: #{tpu_custom_call.1} parent=11 // pred_check_branch
          %257 = sbr.rel (%p255) target = $region20
        $region19: #{tpu_custom_call.1} parent=11 // pred_region
          _
        $region20: #{tpu_custom_call.1} parent=11 // pred_fallthru
          _
        // Predicated region
        $region21: #{tpu_custom_call.1} parent=11 // pred_check
          %p258 = pneg %p211
        $region22: #{tpu_custom_call.1} parent=11 // pred_check_branch
          %260 = sbr.rel (%p258) target = $region24
        $region23: #{tpu_custom_call.1} parent=11 // pred_region
          _
        $region24: #{tpu_custom_call.1} parent=11 // pred_fallthru
          _
      $region12: #{tpu_custom_call.1} parent=5 // pred_fallthru
        _
      %p261 = scmp.lt.s32.totalorder %s21, 18
      // Predicated region
      $region25: #{tpu_custom_call.1} parent=5 // pred_check
        %p262 = pneg %p261
      $region26: #{tpu_custom_call.1} parent=5 // pred_check_branch
        %264 = sbr.rel (%p262) target = $region28
      $region27: #{tpu_custom_call.1} parent=5 // pred_region
        // Predicated region
        $region29: #{tpu_custom_call.1} parent=27 // pred_check
          %p265 = pneg %p62
        $region30: #{tpu_custom_call.1} parent=27 // pred_check_branch
          %267 = sbr.rel (%p265) target = $region32
        $region31: #{tpu_custom_call.1} parent=27 // pred_region
          %s268 = sand.u32 %s52, 1
          %s269 = scalar_lea.sflag [#allocation6], %s268
          %s270 = sand.u32 %s52, 1
          %s271 = smul.addr %s270, 32
          %s272 = scalar_lea.vmem [#allocation5], %s271
          %s273 = smul.u32 8, %s28
          %275 = vsyncadd %s269, 0
          %s276 = smul.addr %s273, 3
          %s277 = sadd.s32 %s30, %s276
          %s278 = smul.addr %s277, 4
          %s279 = scalar_lea.hbm %s0, %s278
          %s280 = sshll.u32 %s279, 4
          %s281 = int_to_ptr.hbm [resolvable:$true] %s280
          %s282 = sshll.u32 %s272, 4
          %s283 = int_to_ptr.vmem [resolvable:$true] %s282
          %288 = dma.hbm_to_vmem [thread:$0]  %s281, 512, %s283, %s269, 192, 64, 4
        $region32: #{tpu_custom_call.1} parent=27 // pred_fallthru
          _
        // Predicated region
        $region33: #{tpu_custom_call.1} parent=27 // pred_check
          %p289 = pneg %p90
        $region34: #{tpu_custom_call.1} parent=27 // pred_check_branch
          %291 = sbr.rel (%p289) target = $region36
        $region35: #{tpu_custom_call.1} parent=27 // pred_region
          %s292 = sand.u32 %s21, 1
          %s293 = scalar_lea.sflag [#allocation8], %s292
          %s294 = sand.u32 %s80, 1
          %s295 = smul.addr %s294, 64
          %s296 = scalar_lea.vmem [#allocation7], %s295
          %s297 = smul.u32 16, %s30
          %299 = vsyncadd %s293, 0
          %s300 = smul.addr %s297, 2
          %s301 = sadd.s32 %s29, %s300
          %s302 = smul.addr %s301, 4
          %s303 = scalar_lea.hbm %s1, %s302
          %s304 = sshll.u32 %s303, 4
          %s305 = int_to_ptr.hbm [resolvable:$true] %s304
          %s306 = sshll.u32 %s296, 4
          %s307 = int_to_ptr.vmem [resolvable:$true] %s306
          %312 = dma.hbm_to_vmem [thread:$0]  %s305, 1024, %s307, %s293, 128, 64, 4
        $region36: #{tpu_custom_call.1} parent=27 // pred_fallthru
          _
        // Predicated region
        $region37: #{tpu_custom_call.1} parent=27 // pred_check
          %p313 = pneg %p116
        $region38: #{tpu_custom_call.1} parent=27 // pred_check_branch
          %315 = sbr.rel (%p313) target = $region40
        $region39: #{tpu_custom_call.1} parent=27 // pred_region
          %p316 = scmp.lt.s32.totalorder %s29, 1
          %s317 = scalar_select %p316, %s29, 1
          %s318 = scalar_lea.vmem %s2, %s317
        $region40: #{tpu_custom_call.1} parent=27 // pred_fallthru
          _
        // Predicated region
        $region41: #{tpu_custom_call.1} parent=27 // pred_check
          %p319 = pneg %p142
        $region42: #{tpu_custom_call.1} parent=27 // pred_check_branch
          %321 = sbr.rel (%p319) target = $region44
        $region43: #{tpu_custom_call.1} parent=27 // pred_region
          %s322 = sand.u32 %s21, 1
          %s323 = scalar_lea.sflag [#allocation8], %s322
          %s324 = sand.u32 %s132, 1
          %s325 = smul.addr %s324, 64
          %s326 = scalar_lea.vmem [#allocation9], %s325
          %s327 = smul.u32 16, %s29
          %329 = vsyncadd %s323, 0
          %s330 = smul.addr %s327, 4
          %s331 = scalar_lea.hbm %s3, %s330
          %s332 = sshll.u32 %s331, 4
          %s333 = int_to_ptr.hbm [resolvable:$true] %s332
          %s334 = sshll.u32 %s326, 4
          %s335 = int_to_ptr.vmem [resolvable:$true] %s334
          %340 = dma.hbm_to_vmem [thread:$0]  %s333, 1024, %s335, %s323, 64, 64, 4
        $region44: #{tpu_custom_call.1} parent=27 // pred_fallthru
          _
      $region28: #{tpu_custom_call.1} parent=5 // pred_fallthru
        _
      %p341 = scmp.le.s32.totalorder 1, %s21
      %p342 = scmp.lt.s32.totalorder %s21, 19
      %p343 = pnand %p341, %p342
      %p344 = pneg %p343
      // Predicated region
      $region45: #{tpu_custom_call.1} parent=5 // pred_check
        _
      $region46: #{tpu_custom_call.1} parent=5 // pred_check_branch
        %346 = sbr.rel (%p343) target = $region48
      $region47: #{tpu_custom_call.1} parent=5 // pred_region
        %s347 = ssub.s32 %s21, 1
        %s348 = sand.u32 %s55, 1
        %s349 = scalar_lea.sflag [#allocation6], %s348
        %s350 = sand.u32 %s55, 1
        %s351 = smul.addr %s350, 32
        %s352 = scalar_lea.vmem [#allocation5], %s351
        // Predicated region
        $region49: #{tpu_custom_call.1} parent=47 // pred_check
          %p353 = pneg %p68
        $region50: #{tpu_custom_call.1} parent=47 // pred_check_branch
          %355 = sbr.rel (%p353) target = $region52
        $region51: #{tpu_custom_call.1} parent=47 // pred_region
          %357 = dma.done %s349, 512
        $region52: #{tpu_custom_call.1} parent=47 // pred_fallthru
          _
        %s358 = sand.u32 %s26, 1
        %s359 = scalar_lea.sflag [#allocation8], %s358
        %s360 = sand.u32 %s83, 1
        %s361 = smul.addr %s360, 64
        %s362 = scalar_lea.vmem [#allocation7], %s361
        // Predicated region
        $region53: #{tpu_custom_call.1} parent=47 // pred_check
          %p363 = pneg %p96
        $region54: #{tpu_custom_call.1} parent=47 // pred_check_branch
          %365 = sbr.rel (%p363) target = $region56
        $region55: #{tpu_custom_call.1} parent=47 // pred_region
          %367 = dma.done %s359, 1024
        $region56: #{tpu_custom_call.1} parent=47 // pred_fallthru
          _
        %s368 = sand.u32 %s26, 1
        %s369 = scalar_lea.sflag [#allocation8], %s368
        %s370 = sand.u32 %s135, 1
        %s371 = smul.addr %s370, 64
        %s372 = scalar_lea.vmem [#allocation9], %s371
        // Predicated region
        $region57: #{tpu_custom_call.1} parent=47 // pred_check
          %p373 = pneg %p148
        $region58: #{tpu_custom_call.1} parent=47 // pred_check_branch
          %375 = sbr.rel (%p373) target = $region60
        $region59: #{tpu_custom_call.1} parent=47 // pred_region
          %377 = dma.done %s369, 1024
        $region60: #{tpu_custom_call.1} parent=47 // pred_fallthru
          _
        %s378 = sand.u32 %s55, 1
        %s379 = scalar_lea.sflag [#allocation6], %s378
        %s380 = sand.u32 %s55, 1
        %s381 = smul.addr %s380, 32
        %s382 = scalar_lea.vmem [#allocation5], %s381
        %p383 = pneg %p68
        %p384 = pneg %p65
        %s385 = sand.u32 %s26, 1
        %s386 = scalar_lea.sflag [#allocation8], %s385
        %s387 = sand.u32 %s83, 1
        %s388 = smul.addr %s387, 64
        %s389 = scalar_lea.vmem [#allocation7], %s388
        %p390 = pneg %p96
        %p391 = pneg %p93
        %p392 = scmp.lt.s32.totalorder %s32, 1
        %s393 = scalar_select %p392, %s32, 1
        %s394 = scalar_lea.vmem %s2, %s393
        %p395 = pneg %p122
        %p396 = pneg %p119
        %s397 = sand.u32 %s26, 1
        %s398 = scalar_lea.sflag [#allocation8], %s397
        %s399 = sand.u32 %s135, 1
        %s400 = smul.addr %s399, 64
        %s401 = scalar_lea.vmem [#allocation9], %s400
        %p402 = pneg %p148
        %p403 = pneg %p145
        %p404 = pneg %p169
        %p405 = pneg %p166
        %p406 = pneg %p190
        %p407 = pneg %p187
        %p408 = pneg %p211
        %p409 = pneg %p208
        %p410 = pneg %p237
        %p411 = pneg %p234
        %s412 = smul.u32 8, %s31
        %p413 = scmp.lt.s32.totalorder %s412, 23
        %s414 = scalar_select %p413, %s412, 23
        %s415 = smul.addr %s414, 8
        %s416 = scalar_lea.vmem %s7, %s415
        %s417 = smul.u32 8, %s31
        %s418 = smul.u32 16, %s33
        %p419 = scmp.lt.s32.totalorder %s32, 1
        %s420 = scalar_select %p419, %s32, 1
        %s421 = scalar_lea.vmem %s2, %s420
        %s422 = smul.u32 16, %s32
        %s423 = smul.u32 8, %s31
        %p424 = scmp.lt.s32.totalorder %s423, 23
        %s425 = scalar_select %p424, %s423, 23
        %s426 = smul.addr %s425, 8
        %s427 = scalar_lea.vmem %s7, %s426
        %s428 = smul.u32 8, %s31
        %p429 = scmp.eq.s32.totalorder %s33, 0
        // Predicated region
        $region61: #{tpu_custom_call.1} parent=47 // pred_check
          %p430 = pneg %p429
        $region62: #{tpu_custom_call.1} parent=47 // pred_check_branch
          %432 = sbr.rel (%p430) target = $region64
        $region63: #{tpu_custom_call.1} parent=47 // pred_region
          %v433 = vld [vmem:[%s421] sm:$0x1]
          %v435 = vperm.slane %v433, 0
          %437 = vst [vmem:[#allocation2] sm:$0xff] %v435
          %438 = vst [vmem:[#allocation2 + $0x8] sm:$0xff] %v435
          %439 = vst [vmem:[#allocation2 + $0x10] sm:$0xff] %v435
          %440 = vst [vmem:[#allocation2 + $0x18] sm:$0xff] %v435
          %441 = vst [vmem:[#allocation2 + $0x20] sm:$0xff] %v435
          %442 = vst [vmem:[#allocation2 + $0x28] sm:$0xff] %v435
          %443 = vst [vmem:[#allocation2 + $0x30] sm:$0xff] %v435
          %444 = vst [vmem:[#allocation2 + $0x38] sm:$0xff] %v435
        $region64: #{tpu_custom_call.1} parent=47 // pred_fallthru
          _
        %p445 = scmp.eq.s32.totalorder %s32, 0
        %p446 = pnand %p445, %p429
        %p447 = pneg %p446
        // Predicated region
        $region65: #{tpu_custom_call.1} parent=47 // pred_check
          _
        $region66: #{tpu_custom_call.1} parent=47 // pred_check_branch
          %449 = sbr.rel (%p446) target = $region68
        $region67: #{tpu_custom_call.1} parent=47 // pred_region
          %v450 = vld [vmem:[%s4] sm:$0x1]
          %v452 = vperm.slane %v450, 0
          %454 = vst [vmem:[#allocation3] sm:$0xff] %v452
          %455 = vst [vmem:[#allocation3 + $0x8] sm:$0xff] %v452
          %456 = vst [vmem:[#allocation3 + $0x10] sm:$0xff] %v452
          %457 = vst [vmem:[#allocation3 + $0x18] sm:$0xff] %v452
          %458 = vst [vmem:[#allocation3 + $0x20] sm:$0xff] %v452
          %459 = vst [vmem:[#allocation3 + $0x28] sm:$0xff] %v452
          %460 = vst [vmem:[#allocation3 + $0x30] sm:$0xff] %v452
          %461 = vst [vmem:[#allocation3 + $0x38] sm:$0xff] %v452
        $region68: #{tpu_custom_call.1} parent=47 // pred_fallthru
          _
        %v462 = vld [vmem:[#allocation2] sm:$0xff]
        %v463 = vld [vmem:[#allocation2 + $0x8] sm:$0xff]
        %v464 = vld [vmem:[#allocation2 + $0x10] sm:$0xff]
        %v465 = vld [vmem:[#allocation2 + $0x18] sm:$0xff]
        %v466 = vld [vmem:[#allocation2 + $0x20] sm:$0xff]
        %v467 = vld [vmem:[#allocation2 + $0x28] sm:$0xff]
        %v468 = vld [vmem:[#allocation2 + $0x30] sm:$0xff]
        %v469 = vld [vmem:[#allocation2 + $0x38] sm:$0xff]
        %v470 = vld [vmem:[%s352] sm:$0xf]
        %v471 = vld [vmem:[%s352 + $0x4] sm:$0xf]
        %v472 = vld [vmem:[%s352 + $0x8] sm:$0xf]
        %v473 = vld [vmem:[%s352 + $0xc] sm:$0xf]
        %v474 = vld [vmem:[%s352 + $0x10] sm:$0xf]
        %v475 = vld [vmem:[%s352 + $0x14] sm:$0xf]
        %v476 = vld [vmem:[%s352 + $0x18] sm:$0xf]
        %v477 = vld [vmem:[%s352 + $0x1c] sm:$0xf]
        %v478 = vld [vmem:[%s362] sm:$0xf]
        %v479 = vld [vmem:[%s362 + $0x4] sm:$0xf]
        %v480 = vld [vmem:[%s362 + $0x8] sm:$0xf]
        %v481 = vld [vmem:[%s362 + $0xc] sm:$0xf]
        %v482 = vld [vmem:[%s362 + $0x10] sm:$0xf]
        %v483 = vld [vmem:[%s362 + $0x14] sm:$0xf]
        %v484 = vld [vmem:[%s362 + $0x18] sm:$0xf]
        %v485 = vld [vmem:[%s362 + $0x1c] sm:$0xf]
        %v486 = vld [vmem:[%s362 + $0x20] sm:$0xf]
        %v487 = vld [vmem:[%s362 + $0x24] sm:$0xf]
        %v488 = vld [vmem:[%s362 + $0x28] sm:$0xf]
        %v489 = vld [vmem:[%s362 + $0x2c] sm:$0xf]
        %v490 = vld [vmem:[%s362 + $0x30] sm:$0xf]
        %v491 = vld [vmem:[%s362 + $0x34] sm:$0xf]
        %v492 = vld [vmem:[%s362 + $0x38] sm:$0xf]
        %v493 = vld [vmem:[%s362 + $0x3c] sm:$0xf]
        %v502 = vunpack.c.l.b16 %v470
        %v503 = vunpack.c.l.b16 %v471
        %v504 = vunpack.c.l.b16 %v472
        %v505 = vunpack.c.l.b16 %v473
        %v506 = vunpack.c.l.b16 %v474
        %v507 = vunpack.c.l.b16 %v475
        %v508 = vunpack.c.l.b16 %v476
        %v509 = vunpack.c.l.b16 %v477
        %v510 = vpack.c.b16 %v503, %v502
        %v511 = vpack.c.b16 %v505, %v504
        %v512 = vpack.c.b16 %v507, %v506
        %v513 = vpack.c.b16 %v509, %v508
        %v534 = vunpack.c.l.b16 %v478
        %v535 = vunpack.c.l.b16 %v479
        %v536 = vunpack.c.l.b16 %v480
        %v537 = vunpack.c.l.b16 %v481
        %v538 = vunpack.c.l.b16 %v482
        %v539 = vunpack.c.l.b16 %v483
        %v540 = vunpack.c.l.b16 %v484
        %v541 = vunpack.c.l.b16 %v485
        %v542 = vunpack.c.l.b16 %v486
        %v543 = vunpack.c.l.b16 %v487
        %v544 = vunpack.c.l.b16 %v488
        %v545 = vunpack.c.l.b16 %v489
        %v546 = vunpack.c.l.b16 %v490
        %v547 = vunpack.c.l.b16 %v491
        %v548 = vunpack.c.l.b16 %v492
        %v549 = vunpack.c.l.b16 %v493
        %v550 = vpack.c.b16 %v535, %v534
        %v551 = vpack.c.b16 %v537, %v536
        %v552 = vpack.c.b16 %v539, %v538
        %v553 = vpack.c.b16 %v541, %v540
        %v554 = vpack.c.b16 %v543, %v542
        %v555 = vpack.c.b16 %v545, %v544
        %v556 = vpack.c.b16 %v547, %v546
        %v557 = vpack.c.b16 %v549, %v548
        %566 = vmatpush.bf16.msra.mxu0 %v557
        %567 = vmatpush.bf16.msra.mxu0 %v556
        %568 = vmatpush.bf16.msra.mxu0 %v555
        %569 = vmatpush.bf16.msra.mxu0 %v554
        %570 = vmatpush.bf16.msra.mxu0 %v553
        %571 = vmatpush.bf16.msra.mxu0 %v552
        %572 = vmatpush.bf16.msra.mxu0 %v551
        %573 = vmatpush.bf16.msra.mxu0 %v550
        %574 = vmatmul.bf16.gmra.mxu0 %v510
        %v575 = vpop.f32.mrf.mxu0
        %v576 = vadd.f32 0.0, %v575
        %v577 = vpop.f32.mrf.mxu0
        %v578 = vadd.f32 0.0, %v577
        %579 = vmatmul.bf16.gmra.mxu0 %v511
        %v580 = vpop.f32.mrf.mxu0
        %v581 = vadd.f32 0.0, %v580
        %v582 = vpop.f32.mrf.mxu0
        %v583 = vadd.f32 0.0, %v582
        %584 = vmatmul.bf16.gmra.mxu0 %v512
        %v585 = vpop.f32.mrf.mxu0
        %v586 = vadd.f32 0.0, %v585
        %v587 = vpop.f32.mrf.mxu0
        %v588 = vadd.f32 0.0, %v587
        %589 = vmatmul.bf16.gmra.mxu0 %v513
        %v590 = vpop.f32.mrf.mxu0
        %v591 = vadd.f32 0.0, %v590
        %v592 = vpop.f32.mrf.mxu0
        %v593 = vadd.f32 0.0, %v592
        %594 = vdwg.mxu0
        %v595 = vadd.f32 %v462, %v576
        %v596 = vadd.f32 %v463, %v578
        %v597 = vadd.f32 %v464, %v581
        %v598 = vadd.f32 %v465, %v583
        %v599 = vadd.f32 %v466, %v586
        %v600 = vadd.f32 %v467, %v588
        %v601 = vadd.f32 %v468, %v591
        %v602 = vadd.f32 %v469, %v593
        %603 = vst [vmem:[#allocation2] sm:$0xff] %v595
        %604 = vst [vmem:[#allocation2 + $0x8] sm:$0xff] %v596
        %605 = vst [vmem:[#allocation2 + $0x10] sm:$0xff] %v597
        %606 = vst [vmem:[#allocation2 + $0x18] sm:$0xff] %v598
        %607 = vst [vmem:[#allocation2 + $0x20] sm:$0xff] %v599
        %608 = vst [vmem:[#allocation2 + $0x28] sm:$0xff] %v600
        %609 = vst [vmem:[#allocation2 + $0x30] sm:$0xff] %v601
        %610 = vst [vmem:[#allocation2 + $0x38] sm:$0xff] %v602
        %p611 = scmp.eq.s32.totalorder %s33, 2
        // Predicated region
        $region69: #{tpu_custom_call.1} parent=47 // pred_check
          %p612 = pneg %p611
        $region70: #{tpu_custom_call.1} parent=47 // pred_check_branch
          %614 = sbr.rel (%p612) target = $region72
        $region71: #{tpu_custom_call.1} parent=47 // pred_region
          %v615 = vld [vmem:[#allocation2] sm:$0xff]
          %v616 = vld [vmem:[#allocation2 + $0x8] sm:$0xff]
          %v617 = vld [vmem:[#allocation2 + $0x10] sm:$0xff]
          %v618 = vld [vmem:[#allocation2 + $0x18] sm:$0xff]
          %v619 = vld [vmem:[#allocation2 + $0x20] sm:$0xff]
          %v620 = vld [vmem:[#allocation2 + $0x28] sm:$0xff]
          %v621 = vld [vmem:[#allocation2 + $0x30] sm:$0xff]
          %v622 = vld [vmem:[#allocation2 + $0x38] sm:$0xff]
          %v623 = vmax.f32 %v615, 0.0
          %v624 = vmax.f32 %v616, 0.0
          %v625 = vmax.f32 %v617, 0.0
          %v626 = vmax.f32 %v618, 0.0
          %v627 = vmax.f32 %v619, 0.0
          %v628 = vmax.f32 %v620, 0.0
          %v629 = vmax.f32 %v621, 0.0
          %v630 = vmax.f32 %v622, 0.0
          %v631 = vpack.c.bf16 %v624, %v623
          %v632 = vpack.c.bf16 %v626, %v625
          %v633 = vpack.c.bf16 %v628, %v627
          %v634 = vpack.c.bf16 %v630, %v629
          %v635 = vld [vmem:[#allocation3] sm:$0xff]
          %v636 = vld [vmem:[#allocation3 + $0x8] sm:$0xff]
          %v637 = vld [vmem:[#allocation3 + $0x10] sm:$0xff]
          %v638 = vld [vmem:[#allocation3 + $0x18] sm:$0xff]
          %v639 = vld [vmem:[#allocation3 + $0x20] sm:$0xff]
          %v640 = vld [vmem:[#allocation3 + $0x28] sm:$0xff]
          %v641 = vld [vmem:[#allocation3 + $0x30] sm:$0xff]
          %v642 = vld [vmem:[#allocation3 + $0x38] sm:$0xff]
          %v643 = vld [vmem:[%s372] sm:$0xf]
          %v644 = vld [vmem:[%s372 + $0x4] sm:$0xf]
          %v645 = vld [vmem:[%s372 + $0x8] sm:$0xf]
          %v646 = vld [vmem:[%s372 + $0xc] sm:$0xf]
          %v647 = vld [vmem:[%s372 + $0x10] sm:$0xf]
          %v648 = vld [vmem:[%s372 + $0x14] sm:$0xf]
          %v649 = vld [vmem:[%s372 + $0x18] sm:$0xf]
          %v650 = vld [vmem:[%s372 + $0x1c] sm:$0xf]
          %v651 = vld [vmem:[%s372 + $0x20] sm:$0xf]
          %v652 = vld [vmem:[%s372 + $0x24] sm:$0xf]
          %v653 = vld [vmem:[%s372 + $0x28] sm:$0xf]
          %v654 = vld [vmem:[%s372 + $0x2c] sm:$0xf]
          %v655 = vld [vmem:[%s372 + $0x30] sm:$0xf]
          %v656 = vld [vmem:[%s372 + $0x34] sm:$0xf]
          %v657 = vld [vmem:[%s372 + $0x38] sm:$0xf]
          %v658 = vld [vmem:[%s372 + $0x3c] sm:$0xf]
          %v675 = vunpack.c.l.b16 %v643
          %v676 = vunpack.c.l.b16 %v644
          %v677 = vunpack.c.l.b16 %v645
          %v678 = vunpack.c.l.b16 %v646
          %v679 = vunpack.c.l.b16 %v647
          %v680 = vunpack.c.l.b16 %v648
          %v681 = vunpack.c.l.b16 %v649
          %v682 = vunpack.c.l.b16 %v650
          %v683 = vunpack.c.l.b16 %v651
          %v684 = vunpack.c.l.b16 %v652
          %v685 = vunpack.c.l.b16 %v653
          %v686 = vunpack.c.l.b16 %v654
          %v687 = vunpack.c.l.b16 %v655
          %v688 = vunpack.c.l.b16 %v656
          %v689 = vunpack.c.l.b16 %v657
          %v690 = vunpack.c.l.b16 %v658
          %v691 = vpack.c.b16 %v676, %v675
          %v692 = vpack.c.b16 %v678, %v677
          %v693 = vpack.c.b16 %v680, %v679
          %v694 = vpack.c.b16 %v682, %v681
          %v695 = vpack.c.b16 %v684, %v683
          %v696 = vpack.c.b16 %v686, %v685
          %v697 = vpack.c.b16 %v688, %v687
          %v698 = vpack.c.b16 %v690, %v689
          %707 = vmatpush.bf16.msra.mxu0 %v698
          %708 = vmatpush.bf16.msra.mxu0 %v697
          %709 = vmatpush.bf16.msra.mxu0 %v696
          %710 = vmatpush.bf16.msra.mxu0 %v695
          %711 = vmatpush.bf16.msra.mxu0 %v694
          %712 = vmatpush.bf16.msra.mxu0 %v693
          %713 = vmatpush.bf16.msra.mxu0 %v692
          %714 = vmatpush.bf16.msra.mxu0 %v691
          %715 = vmatmul.bf16.gmra.mxu0 %v631
          %v716 = vpop.f32.mrf.mxu0
          %v717 = vadd.f32 0.0, %v716
          %v718 = vpop.f32.mrf.mxu0
          %v719 = vadd.f32 0.0, %v718
          %720 = vmatmul.bf16.gmra.mxu0 %v632
          %v721 = vpop.f32.mrf.mxu0
          %v722 = vadd.f32 0.0, %v721
          %v723 = vpop.f32.mrf.mxu0
          %v724 = vadd.f32 0.0, %v723
          %725 = vmatmul.bf16.gmra.mxu0 %v633
          %v726 = vpop.f32.mrf.mxu0
          %v727 = vadd.f32 0.0, %v726
          %v728 = vpop.f32.mrf.mxu0
          %v729 = vadd.f32 0.0, %v728
          %730 = vmatmul.bf16.gmra.mxu0 %v634
          %v731 = vpop.f32.mrf.mxu0
          %v732 = vadd.f32 0.0, %v731
          %v733 = vpop.f32.mrf.mxu0
          %v734 = vadd.f32 0.0, %v733
          %735 = vdwg.mxu0
          %v736 = vadd.f32 %v635, %v717
          %v737 = vadd.f32 %v636, %v719
          %v738 = vadd.f32 %v637, %v722
          %v739 = vadd.f32 %v638, %v724
          %v740 = vadd.f32 %v639, %v727
          %v741 = vadd.f32 %v640, %v729
          %v742 = vadd.f32 %v641, %v732
          %v743 = vadd.f32 %v642, %v734
          %744 = vst [vmem:[#allocation3] sm:$0xff] %v736
          %745 = vst [vmem:[#allocation3 + $0x8] sm:$0xff] %v737
          %746 = vst [vmem:[#allocation3 + $0x10] sm:$0xff] %v738
          %747 = vst [vmem:[#allocation3 + $0x18] sm:$0xff] %v739
          %748 = vst [vmem:[#allocation3 + $0x20] sm:$0xff] %v740
          %749 = vst [vmem:[#allocation3 + $0x28] sm:$0xff] %v741
          %750 = vst [vmem:[#allocation3 + $0x30] sm:$0xff] %v742
          %751 = vst [vmem:[#allocation3 + $0x38] sm:$0xff] %v743
        $region72: #{tpu_custom_call.1} parent=47 // pred_fallthru
          _
        %p752 = scmp.eq.s32.totalorder %s32, 1
        %p753 = pnand %p752, %p611
        %p754 = pneg %p753
        // Predicated region
        $region73: #{tpu_custom_call.1} parent=47 // pred_check
          _
        $region74: #{tpu_custom_call.1} parent=47 // pred_check_branch
          %756 = sbr.rel (%p753) target = $region76
        $region75: #{tpu_custom_call.1} parent=47 // pred_region
          %v757 = vld [vmem:[#allocation3] sm:$0xff]
          %v758 = vld [vmem:[#allocation3 + $0x8] sm:$0xff]
          %v759 = vld [vmem:[#allocation3 + $0x10] sm:$0xff]
          %v760 = vld [vmem:[#allocation3 + $0x18] sm:$0xff]
          %v761 = vld [vmem:[#allocation3 + $0x20] sm:$0xff]
          %v762 = vld [vmem:[#allocation3 + $0x28] sm:$0xff]
          %v763 = vld [vmem:[#allocation3 + $0x30] sm:$0xff]
          %v764 = vld [vmem:[#allocation3 + $0x38] sm:$0xff]
          %v765 = vmax.f32 %v757, 0.0
          %v766 = vmax.f32 %v758, 0.0
          %v767 = vmax.f32 %v759, 0.0
          %v768 = vmax.f32 %v760, 0.0
          %v769 = vmax.f32 %v761, 0.0
          %v770 = vmax.f32 %v762, 0.0
          %v771 = vmax.f32 %v763, 0.0
          %v772 = vmax.f32 %v764, 0.0
          %v773 = vld [vmem:[%s5] sm:$0x1]
          %v775 = vperm.slane %v773, 0
          %v777 = vmul.f32 %v765, %v775
          %v778 = vmul.f32 %v766, %v775
          %v779 = vmul.f32 %v767, %v775
          %v780 = vmul.f32 %v768, %v775
          %v781 = vmul.f32 %v769, %v775
          %v782 = vmul.f32 %v770, %v775
          %v783 = vmul.f32 %v771, %v775
          %v784 = vmul.f32 %v772, %v775
          %785 = vadd.xlane.f32.xlu0 %v777
          %v786 = vpop.xlane.xlu0 %785
          %787 = vadd.xlane.f32.xlu0 %v778
          %v788 = vpop.xlane.xlu0 %787
          %789 = vadd.xlane.f32.xlu0 %v779
          %v790 = vpop.xlane.xlu0 %789
          %791 = vadd.xlane.f32.xlu0 %v780
          %v792 = vpop.xlane.xlu0 %791
          %793 = vadd.xlane.f32.xlu0 %v781
          %v794 = vpop.xlane.xlu0 %793
          %795 = vadd.xlane.f32.xlu0 %v782
          %v796 = vpop.xlane.xlu0 %795
          %797 = vadd.xlane.f32.xlu0 %v783
          %v798 = vpop.xlane.xlu0 %797
          %799 = vadd.xlane.f32.xlu0 %v784
          %v800 = vpop.xlane.xlu0 %799
          %v801 = vld [vmem:[#allocation4] sm:$0x1]
          %v803 = vperm.slane %v801, 0
          %v805 = vadd.f32 %v786, %v803
          %v806 = vadd.f32 %v788, %v803
          %v807 = vadd.f32 %v790, %v803
          %v808 = vadd.f32 %v792, %v803
          %v809 = vadd.f32 %v794, %v803
          %v810 = vadd.f32 %v796, %v803
          %v811 = vadd.f32 %v798, %v803
          %v812 = vadd.f32 %v800, %v803
          %v813 = vsub.f32 0.0, %v805
          %v814 = vsub.f32 0.0, %v806
          %v815 = vsub.f32 0.0, %v807
          %v816 = vsub.f32 0.0, %v808
          %v817 = vsub.f32 0.0, %v809
          %v818 = vsub.f32 0.0, %v810
          %v819 = vsub.f32 0.0, %v811
          %v820 = vsub.f32 0.0, %v812
          %v821 = vmul.f32 %v813, 1.442695
          %v822 = vpow.pop %v821
          %v823 = vmul.f32 %v814, 1.442695
          %v824 = vpow.pop %v823
          %v825 = vmul.f32 %v815, 1.442695
          %v826 = vpow.pop %v825
          %v827 = vmul.f32 %v816, 1.442695
          %v828 = vpow.pop %v827
          %v829 = vmul.f32 %v817, 1.442695
          %v830 = vpow.pop %v829
          %v831 = vmul.f32 %v818, 1.442695
          %v832 = vpow.pop %v831
          %v833 = vmul.f32 %v819, 1.442695
          %v834 = vpow.pop %v833
          %v835 = vmul.f32 %v820, 1.442695
          %v836 = vpow.pop %v835
          %v837 = vadd.f32 %v822, 1.0
          %v838 = vadd.f32 %v824, 1.0
          %v839 = vadd.f32 %v826, 1.0
          %v840 = vadd.f32 %v828, 1.0
          %v841 = vadd.f32 %v830, 1.0
          %v842 = vadd.f32 %v832, 1.0
          %v843 = vadd.f32 %v834, 1.0
          %v844 = vadd.f32 %v836, 1.0
          %v845 = vrcp.pop %v837
          %v846 = vrcp.pop %v838
          %v847 = vrcp.pop %v839
          %v848 = vrcp.pop %v840
          %v849 = vrcp.pop %v841
          %v850 = vrcp.pop %v842
          %v851 = vrcp.pop %v843
          %v852 = vrcp.pop %v844
          %vm853 = vcmask 7168
          %854 = vst.msk [vmem:[%s427] sm:$0xff] %vm853, %v845
          %855 = vst.msk [vmem:[%s427 + $0x8] sm:$0xff] %vm853, %v846
          %856 = vst.msk [vmem:[%s427 + $0x10] sm:$0xff] %vm853, %v847
          %857 = vst.msk [vmem:[%s427 + $0x18] sm:$0xff] %vm853, %v848
          %858 = vst.msk [vmem:[%s427 + $0x20] sm:$0xff] %vm853, %v849
          %859 = vst.msk [vmem:[%s427 + $0x28] sm:$0xff] %vm853, %v850
          %860 = vst.msk [vmem:[%s427 + $0x30] sm:$0xff] %vm853, %v851
          %861 = vst.msk [vmem:[%s427 + $0x38] sm:$0xff] %vm853, %v852
        $region76: #{tpu_custom_call.1} parent=47 // pred_fallthru
          _
        %s862 = smul.u32 8, %s31
        %p863 = scmp.lt.s32.totalorder %s862, 23
        %s864 = scalar_select %p863, %s862, 23
        %s865 = smul.addr %s864, 8
        %s866 = scalar_lea.vmem %s7, %s865
        // Predicated region
        $region77: #{tpu_custom_call.1} parent=47 // pred_check
          %p867 = pneg %p234
        $region78: #{tpu_custom_call.1} parent=47 // pred_check_branch
          %869 = sbr.rel (%p867) target = $region80
        $region79: #{tpu_custom_call.1} parent=47 // pred_region
          %s870 = smul.u32 8, %s31
        $region80: #{tpu_custom_call.1} parent=47 // pred_fallthru
          _
      $region48: #{tpu_custom_call.1} parent=5 // pred_fallthru
        _
      %p871 = scmp.le.s32.totalorder 2, %s21
      // Predicated region
      $region81: #{tpu_custom_call.1} parent=5 // pred_check
        %p872 = pneg %p871
      $region82: #{tpu_custom_call.1} parent=5 // pred_check_branch
        %874 = sbr.rel (%p872) target = $region84
      $region83: #{tpu_custom_call.1} parent=5 // pred_region
        %s875 = ssub.s32 %s21, 2
        // Predicated region
        $region85: #{tpu_custom_call.1} parent=83 // pred_check
          %p876 = pneg %p240
        $region86: #{tpu_custom_call.1} parent=83 // pred_check_branch
          %878 = sbr.rel (%p876) target = $region88
        $region87: #{tpu_custom_call.1} parent=83 // pred_region
          %s879 = smul.u32 8, %s34
          %p880 = scmp.lt.s32.totalorder %s879, 23
          %s881 = scalar_select %p880, %s879, 23
          %s882 = smul.addr %s881, 8
          %s883 = scalar_lea.vmem %s7, %s882
        $region88: #{tpu_custom_call.1} parent=83 // pred_fallthru
          _
      $region84: #{tpu_custom_call.1} parent=5 // pred_fallthru
        _
    $region6: #{tpu_custom_call.1} parent=1 // loop_footer
      %s25 = sadd.s32 1, %s21
    $region7: #{tpu_custom_call.1} parent=1 // loop_footer_branch
      %20 = sbr.rel target = $region3
    $region8: #{tpu_custom_call.1} parent=1 // loop_exit
      _
    %884 = vsyncpa [#allocation6], 1
    %s885 = scalar_lea.sflag [#allocation6], 1
    %886 = vsyncpa %s885, 1
    %887 = vsyncpa [#allocation8], 1
    %s888 = scalar_lea.sflag [#allocation8], 1
    %889 = vsyncpa %s888, 1

</llo_original>
